<compile_context>
chip_gen: v7x
topology: tpu7x:2x2x1
jax: 0.10.0
libtpu: 0.0.40
codegen_flags: <defaults>
</compile_context>

<pallas_src>
import jax
import jax.numpy as jnp
from jax import lax
from jax.experimental import pallas as pl
from jax.experimental.pallas import tpu as pltpu


# ----------------------------------------------------------------------------
# Kernel: batched numerical matrix rank via Gaussian elimination with complete
# pivoting; one feature map per lane, vectorized over a block of C_tile maps.
# ----------------------------------------------------------------------------
def _rank_kernel(x_ref, rank_ref):
    """x_ref: (H, W, B) feature maps (one per lane) -> rank_ref: (1, B)."""
    A0 = x_ref[...].astype(jnp.float32)
    H, W, B = A0.shape
    eps = float(jnp.finfo(jnp.float32).eps)

    # TODO(synk): torch.matrix_rank's default tolerance uses sigma_max from an
    # SVD; SVD has no Pallas equivalent, so max|A| (a lower bound on sigma_max)
    # is used.  Identical rank for generic, well-conditioned activations.
    maxabs0 = jnp.max(jnp.max(jnp.abs(A0), axis=0), axis=0, keepdims=True)  # (1,B)
    tol = maxabs0 * jnp.float32(max(H, W) * eps)                            # (1,B)

    h_iota = lax.broadcasted_iota(jnp.int32, (H, B), 0)
    w_iota = lax.broadcasted_iota(jnp.int32, (W, B), 0)

    def step(_, carry):
        A, col_used, rank = carry
        cm = 1.0 - col_used                                            # (W,B)
        # Column-wise max over H: leading-axis (cross-vreg VALU) reduce.  Used
        # rows of A are exactly zero (see `factor` below) so no row mask is
        # needed; the column mask is applied at (W,B) size, not full size.
        col_max = jnp.max(jnp.abs(A), axis=0) * cm                     # (W,B)
        pv = jnp.max(col_max, axis=0, keepdims=True)                   # (1,B)
        active = (pv > tol).astype(jnp.float32)                        # (1,B)
        # First unused column attaining the global max (bit-exact equality:
        # the masked values are products with 0.0/1.0 only).
        c_star = jnp.min(jnp.where(col_max == pv, w_iota, W),
                         axis=0, keepdims=True)                        # (1,B)
        col_hit = w_iota == c_star                                     # (W,B)
        col_oh = col_hit.astype(jnp.float32)
        # Pivot column: the ONLY full-size sublane (W-axis / XLU) reduce/step.
        pcol = jnp.sum(A * col_oh[None, :, :], axis=1)                 # (H,B)
        # First row attaining the max inside that column (used rows are 0).
        r_star = jnp.min(jnp.where(jnp.abs(pcol) == pv, h_iota, H),
                         axis=0, keepdims=True)                        # (1,B)
        row_hit = h_iota == r_star                                     # (H,B)
        row_oh = row_hit.astype(jnp.float32)
        prow = jnp.sum(A * row_oh[:, None, :], axis=0)                 # (W,B)
        pvv = jnp.sum(pcol * row_oh, axis=0, keepdims=True)            # (1,B)
        denom = jnp.where(jnp.abs(pvv) > 0.0, pvv, 1.0)
        inv = 1.0 / denom          # exact (1,B) divide; see header re approx
        # factor == 1.0 exactly on the pivot row -> the pivot row is zeroed
        # exactly by the update, maintaining "used rows of A are exactly 0"
        # (this replaces the full-size row-mask multiply of v2).
        factor = jnp.where(row_hit, jnp.float32(1.0), pcol * inv) * active  # (H,B)
        A = A - factor[:, None, :] * prow[None, :, :]
        col_used = jnp.maximum(col_used, col_oh * active)
        return A, col_used, rank + active

    carry0 = (A0,
              jnp.zeros((W, B), jnp.float32),
              jnp.zeros((1, B), jnp.float32))
    _, _, rank = lax.fori_loop(0, min(H, W), step, carry0)
    rank_ref[...] = rank


def _choose_c_block(C, H, W):
    """Channels per grid step (lanes) + scoped VMEM limit.

    The kernel is compute-bound, so 512 lanes per step is plenty; C_tile must
    be a multiple of 128 (or equal to C) for the lane constraint, must divide
    C (no padding waste), and we prefer >= 2 tiles when C >= 256 so megacore
    can shard the C axis even at batch 1.
    """
    try:
        vmem_cap = int(pltpu.get_tpu_info().vmem_capacity_bytes)
    except Exception:
        vmem_cap = 64 * 1024 * 1024        # assume the smallest (v7x per-core)
    vmem_limit = min((vmem_cap * 3) // 4, 96 * 1024 * 1024)  # 48 MiB v7x, 96 MiB v5e/v6e
    if C <= 128 or (C % 128) != 0:
        # The last block dim must equal the full C when it is not a multiple
        # of 128; single C tile (the N grid axis still provides parallelism).
        return C, vmem_limit
    # ~8 live full-size (H, W, C_tile) f32 arrays at unroll=1: double-buffered
    # input block + A carry + |A| + two one-hot selections + rank-1 update.
    per_lane = H * W * 4 * 8
    budget = (vmem_limit * 2) // 3
    cb = min(C, 512, max(128, (budget // per_lane) // 128 * 128))
    while C % cb:                          # keep cb a divisor of C
        cb -= 128
    if C // cb < 2 and C >= 256 and (C // 2) % 128 == 0:
        cb = C // 2                        # >= 2 parallel C tiles for megacore
    return cb, vmem_limit


def feature_map_ranks_pallas(x, c_block=None):
    """x: (N, H, W, C) channel-minor activations -> (N, C) float32 ranks."""
    N, H, W, C = x.shape
    cb, vmem_limit = _choose_c_block(C, H, W)
    if c_block is not None:                # caller override (must divide C)
        cb = c_block
    out = pl.pallas_call(
        _rank_kernel,
        # (N, 1, C) keeps the output block's trailing dims (1, cb) tile-legal
        # and lane-dense; squeezed back to (N, C) below.
        out_shape=jax.ShapeDtypeStruct((N, 1, C), jnp.float32),
        grid=(N, C // cb),
        in_specs=[pl.BlockSpec((None, H, W, cb), lambda n, c: (n, 0, 0, c))],
        out_specs=pl.BlockSpec((None, 1, cb), lambda n, c: (n, 0, c)),
        compiler_params=pltpu.CompilerParams(
            dimension_semantics=("parallel", "parallel"),
            vmem_limit_bytes=vmem_limit),
    )(x.astype(jnp.float32))
    return out.reshape(N, C)


# ----------------------------------------------------------------------------
# Glue: the (external) "model" is a single synthetic VGG-style conv layer that
# emits channel-minor (NHWC) activations so the feature maps land directly on
# the lane axis -- no separate transpose of the activations.
# ----------------------------------------------------------------------------
def conv2d_nhwc_out(x_nchw, w_oihw, b):
    y = lax.conv_general_dilated(
        x_nchw, w_oihw, window_strides=(1, 1), padding="SAME",
        dimension_numbers=("NCHW", "OIHW", "NHWC"))
    return y + b[None, None, None, :]


class HRankPallas:
    """Pallas port of HRank: average per-channel feature-map rank over batches."""

    def __init__(self, conv_w, conv_b, limit, batches):
        self.conv_w = conv_w
        self.conv_b = conv_b
        self.limit = limit
        self.batches = batches
        self.c_out = conv_w.shape[0]
        self.result = []
        self._reset()

    def _reset(self):
        self.feature_result = jnp.zeros((self.c_out,), jnp.float32)
        self.total = jnp.zeros((), jnp.float32)

    def get_feature_hook(self, output):
        # output: (N, H, W, C) channel-minor activations of the hooked conv.
        n = output.shape[0]
        ranks = feature_map_ranks_pallas(output)          # (N, C) Pallas kernel
        # Hook reduction + running average: tiny (N, C) work, plain jnp (no
        # extra kernel launch).
        c = jnp.sum(ranks, axis=0)                        # (C,)
        new_total = self.total + jnp.float32(n)
        self.feature_result = (self.feature_result * self.total + c) / new_total
        self.total = new_total

    def run_data(self):
        for batch_idx, inputs in enumerate(self.batches):
            if batch_idx == self.limit:
                break
            out = conv2d_nhwc_out(inputs, self.conv_w, self.conv_b)  # model fwd (glue)
            self.get_feature_hook(out)

    def forward(self, to_prune, compress_rate=0.0):
        conv_id = [0, 2, 5, 7, 10, 12, 14, 17, 19, 21, 24, 26, 28, 31, 33]
        self.result = []
        self.run_data()
        fr = [float(v) for v in jax.device_get(self.feature_result).reshape(-1)]
        for fid, rank in enumerate(fr):
            self.result.append(
                ('module.vgg.%d.weight.%d' % (conv_id[to_prune], fid), rank))
        self.result = sorted(self.result, key=lambda a: a[1])
        to_prune_num = int(compress_rate * len(self.result))
        to_prune_list = [item[0] for i, item in enumerate(self.result)
                         if i < to_prune_num]
        self._reset()
        return to_prune_list


if __name__ == "__main__":
    key = jax.random.PRNGKey(0)
    kw, kb, kx = jax.random.split(key, 3)
    N, Cin, Cout, H, W = 2, 3, 4, 16, 16
    limit = 2

    conv_w = 0.1 * jax.random.normal(kw, (Cout, Cin, 3, 3), jnp.float32)
    conv_b = 0.1 * jax.random.normal(kb, (Cout,), jnp.float32)
    batches = [jax.random.normal(jax.random.fold_in(kx, i),
                                 (N, Cin, H, W), jnp.float32)
               for i in range(limit)]

    # sanity: in-kernel Gaussian-elimination rank vs SVD-based matrix_rank
    out0 = conv2d_nhwc_out(batches[0], conv_w, conv_b)        # (N, H, W, Cout)
    kernel_ranks = jax.block_until_ready(feature_map_ranks_pallas(out0))
    ref_ranks = jnp.asarray(
        [[jnp.linalg.matrix_rank(out0[i, :, :, j]) for j in range(Cout)]
         for i in range(N)], jnp.float32)
    assert jnp.all(kernel_ranks == ref_ranks), (kernel_ranks, ref_ranks)

    hrank = HRankPallas(conv_w, conv_b, limit, batches)
    to_prune_list = hrank.forward(to_prune=0, compress_rate=0.5)
    jax.block_until_ready(hrank.feature_result)
    assert len(to_prune_list) == int(0.5 * Cout)
    print("KERNEL_OK")
</pallas_src>

<mosaic_0001>
module attributes {stable_mosaic.version = 11 : i64} {
  func.func @_rank_kernel(%arg0: i32, %arg1: i32, %arg2: memref<1x16x16x4xf32, #tpu.memory_space<vmem>>, %arg3: memref<1x1x4xf32, #tpu.memory_space<vmem>>) attributes {dimension_semantics = [#tpu.dimension_semantics<parallel>, #tpu.dimension_semantics<parallel>], iteration_bounds = array<i64: 2, 1>, scalar_prefetch = 0 : i64, scratch_operands = 0 : i64, tpu.core_type = #tpu.core_type<tc>, window_params = [{transform_indices = @transform_0, window_bounds = array<i64: 1, 16, 16, 4>}, {transform_indices = @transform_1, window_bounds = array<i64: 1, 1, 4>}]} {
    %c0 = arith.constant 0 : index
    %c0_0 = arith.constant 0 : index
    %c0_1 = arith.constant 0 : index
    %c0_2 = arith.constant 0 : index
    %0 = vector.load %arg2[%c0, %c0_0, %c0_1, %c0_2] : memref<1x16x16x4xf32, #tpu.memory_space<vmem>>, vector<1x16x16x4xf32>
    %1 = vector.shape_cast %0 : vector<1x16x16x4xf32> to vector<16x16x4xf32>
    %2 = math.absf %1 : vector<16x16x4xf32>
    %cst = arith.constant dense<0xFF800000> : vector<16x4xf32>
    %3 = vector.multi_reduction <maximumf>, %2, %cst [0] : vector<16x16x4xf32> to vector<16x4xf32>
    %cst_3 = arith.constant dense<0xFF800000> : vector<4xf32>
    %4 = vector.multi_reduction <maximumf>, %3, %cst_3 [0] : vector<16x4xf32> to vector<4xf32>
    %5 = vector.shape_cast %4 : vector<4xf32> to vector<1x4xf32>
    %cst_4 = arith.constant 1.90734863E-6 : f32
    %6 = vector.broadcast %cst_4 : f32 to vector<1x4xf32>
    %7 = arith.mulf %5, %6 : vector<1x4xf32>
    %8 = tpu.iota {dimensions = array<i32: 0>} : vector<16x4xi32>
    %9 = tpu.iota {dimensions = array<i32: 0>} : vector<16x4xi32>
    %cst_5 = arith.constant 0.000000e+00 : f32
    %10 = vector.broadcast %cst_5 : f32 to vector<16x4xf32>
    %cst_6 = arith.constant 0.000000e+00 : f32
    %11 = vector.broadcast %cst_6 : f32 to vector<1x4xf32>
    %c0_i32 = arith.constant 0 : i32
    %c16_i32 = arith.constant 16 : i32
    %12 = arith.addi %c0_i32, %c16_i32 : i32
    %c1_i32 = arith.constant 1 : i32
    %13:3 = scf.for %arg4 = %c0_i32 to %12 step %c1_i32 iter_args(%arg5 = %1, %arg6 = %10, %arg7 = %11) -> (vector<16x16x4xf32>, vector<16x4xf32>, vector<1x4xf32>)  : i32 {
      %cst_10 = arith.constant 1.000000e+00 : f32
      %17 = vector.broadcast %cst_10 : f32 to vector<16x4xf32>
      %18 = arith.subf %17, %arg6 : vector<16x4xf32>
      %19 = math.absf %arg5 : vector<16x16x4xf32>
      %cst_11 = arith.constant dense<0xFF800000> : vector<16x4xf32>
      %20 = vector.multi_reduction <maximumf>, %19, %cst_11 [0] : vector<16x16x4xf32> to vector<16x4xf32>
      %21 = arith.mulf %20, %18 : vector<16x4xf32>
      %cst_12 = arith.constant dense<0xFF800000> : vector<4xf32>
      %22 = vector.multi_reduction <maximumf>, %21, %cst_12 [0] : vector<16x4xf32> to vector<4xf32>
      %23 = vector.shape_cast %22 : vector<4xf32> to vector<1x4xf32>
      %24 = arith.cmpf ogt, %23, %7 : vector<1x4xf32>
      %25 = arith.extui %24 : vector<1x4xi1> to vector<1x4xi32>
      %26 = arith.sitofp %25 : vector<1x4xi32> to vector<1x4xf32>
      %27 = vector.broadcast %23 : vector<1x4xf32> to vector<16x4xf32>
      %28 = arith.cmpf oeq, %21, %27 : vector<16x4xf32>
      %c16_i32_13 = arith.constant 16 : i32
      %29 = vector.broadcast %c16_i32_13 : i32 to vector<16x4xi32>
      %30 = arith.select %28, %9, %29 : vector<16x4xi1>, vector<16x4xi32>
      %cst_14 = arith.constant dense<2147483647> : vector<4xi32>
      %31 = vector.multi_reduction <minsi>, %30, %cst_14 [0] : vector<16x4xi32> to vector<4xi32>
      %32 = vector.shape_cast %31 : vector<4xi32> to vector<1x4xi32>
      %33 = vector.broadcast %32 : vector<1x4xi32> to vector<16x4xi32>
      %34 = arith.cmpi eq, %9, %33 : vector<16x4xi32>
      %35 = arith.extui %34 : vector<16x4xi1> to vector<16x4xi32>
      %36 = arith.sitofp %35 : vector<16x4xi32> to vector<16x4xf32>
      %37 = vector.shape_cast %36 : vector<16x4xf32> to vector<1x16x4xf32>
      %38 = vector.broadcast %37 : vector<1x16x4xf32> to vector<16x16x4xf32>
      %39 = arith.mulf %arg5, %38 : vector<16x16x4xf32>
      %cst_15 = arith.constant dense<0.000000e+00> : vector<16x4xf32>
      %40 = vector.multi_reduction <add>, %39, %cst_15 [1] : vector<16x16x4xf32> to vector<16x4xf32>
      %41 = math.absf %40 : vector<16x4xf32>
      %42 = vector.broadcast %23 : vector<1x4xf32> to vector<16x4xf32>
      %43 = arith.cmpf oeq, %41, %42 : vector<16x4xf32>
      %c16_i32_16 = arith.constant 16 : i32
      %44 = vector.broadcast %c16_i32_16 : i32 to vector<16x4xi32>
      %45 = arith.select %43, %8, %44 : vector<16x4xi1>, vector<16x4xi32>
      %cst_17 = arith.constant dense<2147483647> : vector<4xi32>
      %46 = vector.multi_reduction <minsi>, %45, %cst_17 [0] : vector<16x4xi32> to vector<4xi32>
      %47 = vector.shape_cast %46 : vector<4xi32> to vector<1x4xi32>
      %48 = vector.broadcast %47 : vector<1x4xi32> to vector<16x4xi32>
      %49 = arith.cmpi eq, %8, %48 : vector<16x4xi32>
      %50 = arith.extui %49 : vector<16x4xi1> to vector<16x4xi32>
      %51 = arith.sitofp %50 : vector<16x4xi32> to vector<16x4xf32>
      %52 = vector.shape_cast %51 : vector<16x4xf32> to vector<16x1x4xf32>
      %53 = vector.broadcast %52 : vector<16x1x4xf32> to vector<16x16x4xf32>
      %54 = arith.mulf %arg5, %53 : vector<16x16x4xf32>
      %cst_18 = arith.constant dense<0.000000e+00> : vector<16x4xf32>
      %55 = vector.multi_reduction <add>, %54, %cst_18 [0] : vector<16x16x4xf32> to vector<16x4xf32>
      %56 = arith.mulf %40, %51 : vector<16x4xf32>
      %cst_19 = arith.constant dense<0.000000e+00> : vector<4xf32>
      %57 = vector.multi_reduction <add>, %56, %cst_19 [0] : vector<16x4xf32> to vector<4xf32>
      %58 = vector.shape_cast %57 : vector<4xf32> to vector<1x4xf32>
      %59 = math.absf %58 : vector<1x4xf32>
      %cst_20 = arith.constant 0.000000e+00 : f32
      %60 = vector.broadcast %cst_20 : f32 to vector<1x4xf32>
      %61 = arith.cmpf ogt, %59, %60 : vector<1x4xf32>
      %cst_21 = arith.constant 1.000000e+00 : f32
      %62 = vector.broadcast %cst_21 : f32 to vector<1x4xf32>
      %63 = arith.select %61, %58, %62 : vector<1x4xi1>, vector<1x4xf32>
      %cst_22 = arith.constant 1.000000e+00 : f32
      %64 = vector.broadcast %cst_22 : f32 to vector<1x4xf32>
      %65 = arith.divf %64, %63 : vector<1x4xf32>
      %66 = vector.broadcast %65 : vector<1x4xf32> to vector<16x4xf32>
      %67 = arith.mulf %40, %66 : vector<16x4xf32>
      %cst_23 = arith.constant 1.000000e+00 : f32
      %68 = vector.broadcast %cst_23 : f32 to vector<16x4xf32>
      %69 = arith.select %49, %68, %67 : vector<16x4xi1>, vector<16x4xf32>
      %70 = vector.broadcast %26 : vector<1x4xf32> to vector<16x4xf32>
      %71 = arith.mulf %69, %70 : vector<16x4xf32>
      %72 = vector.shape_cast %71 : vector<16x4xf32> to vector<16x1x4xf32>
      %73 = vector.shape_cast %55 : vector<16x4xf32> to vector<1x16x4xf32>
      %74 = vector.broadcast %72 : vector<16x1x4xf32> to vector<16x16x4xf32>
      %75 = vector.broadcast %73 : vector<1x16x4xf32> to vector<16x16x4xf32>
      %76 = arith.mulf %74, %75 : vector<16x16x4xf32>
      %77 = arith.subf %arg5, %76 : vector<16x16x4xf32>
      %78 = vector.broadcast %26 : vector<1x4xf32> to vector<16x4xf32>
      %79 = arith.mulf %36, %78 : vector<16x4xf32>
      %80 = arith.maximumf %arg6, %79 : vector<16x4xf32>
      %81 = arith.addf %arg7, %26 : vector<1x4xf32>
      scf.yield %77, %80, %81 : vector<16x16x4xf32>, vector<16x4xf32>, vector<1x4xf32>
    }
    %c0_7 = arith.constant 0 : index
    %c0_8 = arith.constant 0 : index
    %c0_9 = arith.constant 0 : index
    %14 = vector.load %arg3[%c0_7, %c0_8, %c0_9] : memref<1x1x4xf32, #tpu.memory_space<vmem>>, vector<1x1x4xf32>
    %15 = vector.shape_cast %14 : vector<1x1x4xf32> to vector<1x4xf32>
    %16 = vector.shape_cast %13#2 : vector<1x4xf32> to vector<1x1x4xf32>
    tpu.vector_store %arg3[%c0_7, %c0_8, %c0_9], %16 {strides = array<i32>} : memref<1x1x4xf32, #tpu.memory_space<vmem>>, vector<1x1x4xf32>,
    return
  }
  func.func @transform_0(%arg0: i32, %arg1: i32) -> (i32, i32, i32, i32) {
    %c0_i32 = arith.constant 0 : i32
    %c0_i32_0 = arith.constant 0 : i32
    %c0_i32_1 = arith.constant 0 : i32
    return %arg0, %c0_i32, %c0_i32_0, %arg1 : i32, i32, i32, i32
  }
  func.func @transform_1(%arg0: i32, %arg1: i32) -> (i32, i32, i32) {
    %c0_i32 = arith.constant 0 : i32
    %c0_i32_0 = arith.constant 0 : i32
    return %arg0, %c0_i32, %arg1 : i32, i32, i32
  }
}

</mosaic_0001>

<llo_original>
// kernel: tpu_custom_call.1
$region0: #{tpu_custom_call.1}
  #allocation0 [shape = 'u32[]', space=smem, size = 0x4, offset = 0x4, fixed_abs, tag = 'smem constant byte address 0x4 - core index']
  #allocation1 [shape = 'u32[144,128]{1,0:T(1,128)}', space=vmem, size = 0x12000, scoped, tag = 'internal scratch']
  %s0 = inlined_call_operand.vmem [shape: f32[2,16,16,4], index: 0, kind: input, shape index: {}]
  %s1 = inlined_call_operand.hbm [shape: f32[2,1,4], index: 1, kind: output, shape index: {}]
  %s2 = sld [smem:[#allocation0]]
  $region44: #{tpu_custom_call.1} parent=0
    _
  %s4 = ssub.s32 1, %s2
  %s5 = scalar_select 0, %s4, %s2
  $region1: #{tpu_custom_call.1} parent=0
    #allocation2 [shape = 'u8[1024]{0}', space=vmem, size = 0x400, scoped, tag = 'output window, operand 0']
    #allocation3 [shape = 's32[2]{0}', space=sflag, size = 0x8, scoped, tag = 'scoped memory for tpu_custom_call.1']
    %6 = vsyncpa [#allocation3], 0
    %s7 = scalar_lea.sflag [#allocation3], 1
    %8 = vsyncpa %s7, 0
    loop: start=0, step=1, limit=4
    $region2: #{tpu_custom_call.1} parent=1 // loop_pre_header
      _
    $region3: #{tpu_custom_call.1} parent=1 // loop_header
      %s10 = sphi 0, %s14
      %p11 = scmp.ge.s32.totalorder %s10, 4
      %s17 = sphi 0, %s29
      %s18 = sphi 0, %s25
      %s19 = sphi 0, %s17
      %s20 = sphi 0, %s18
      %s21 = sphi 0, %s19
      %s22 = sphi 0, %s20
      %s34 = sphi 0, %s36
      %s37 = sphi 0, %s34
      %s38 = sphi 0, %s37
      %s54 = sphi 0, %s38
      %s62 = sphi 0, %s64
      %s65 = sphi 0, %s62
      %s66 = sphi 0, %s65
      %s82 = sphi 0, %s66
    $region4: #{tpu_custom_call.1} parent=1 // loop_header_branch
      %13 = sbr.rel (%p11) target = $region8
    $region5: #{tpu_custom_call.1} parent=1 // loop_body
      %s15 = ssub.s32 %s10, 1
      %s16 = ssub.s32 %s10, 2
      %s23 = sadd.s32 1, %s18
      %p24 = scmp.ge.s32.totalorder %s23, 1
      %s25 = scalar_select %p24, 0, %s23
      %s26 = sadd.s32 1, %s17
      %s27 = scalar_select %p24, %s26, %s17
      %p28 = scmp.ge.s32.totalorder %s27, 2
      %s29 = scalar_select %p28, 0, %s27
      %s30 = ssub.s32 %s17, %s29
      %s31 = ssub.s32 %s18, %s25
      %s32 = sor.u32 %s30, %s31
      %p33 = scmp.eq.s32.totalorder %s32, 0
      %s35 = sadd.s32 %s34, 1
      %s36 = scalar_select %p33, %s34, %s35
      %p39 = pneg %p33
      %p40 = scmp.eq.s32.totalorder %s10, 1
      %p41 = por %p39, %p40
      %p42 = scmp.ne.s32.totalorder %s34, %s37
      %p43 = scmp.eq.s32.totalorder %s10, 0
      %p44 = por %p42, %p43
      %p45 = scmp.ne.s32.totalorder %s34, %s37
      %p46 = scmp.eq.s32.totalorder %s15, 1
      %p47 = por %p45, %p46
      %p48 = scmp.ne.s32.totalorder %s37, %s38
      %p49 = scmp.eq.s32.totalorder %s15, 0
      %p50 = por %p48, %p49
      %p51 = scmp.ne.s32.totalorder %s37, %s38
      %p52 = scmp.eq.s32.totalorder %s16, 1
      %p53 = por %p51, %p52
      %p55 = scmp.ne.s32.totalorder %s38, %s54
      %p56 = scmp.eq.s32.totalorder %s16, 0
      %p57 = por %p55, %p56
      %s58 = ssub.s32 %s17, %s29
      %s59 = ssub.s32 %s18, %s25
      %s60 = sor.u32 %s58, %s59
      %p61 = scmp.eq.s32.totalorder %s60, 0
      %s63 = sadd.s32 %s62, 1
      %s64 = scalar_select %p61, %s62, %s63
      %p67 = pneg %p61
      %p68 = scmp.eq.s32.totalorder %s10, 1
      %p69 = por %p67, %p68
      %p70 = scmp.ne.s32.totalorder %s62, %s65
      %p71 = scmp.eq.s32.totalorder %s10, 0
      %p72 = por %p70, %p71
      %p73 = scmp.ne.s32.totalorder %s62, %s65
      %p74 = scmp.eq.s32.totalorder %s15, 1
      %p75 = por %p73, %p74
      %p76 = scmp.ne.s32.totalorder %s65, %s66
      %p77 = scmp.eq.s32.totalorder %s15, 0
      %p78 = por %p76, %p77
      %p79 = scmp.ne.s32.totalorder %s65, %s66
      %p80 = scmp.eq.s32.totalorder %s16, 1
      %p81 = por %p79, %p80
      %p83 = scmp.ne.s32.totalorder %s66, %s82
      %p84 = scmp.eq.s32.totalorder %s16, 0
      %p85 = por %p83, %p84
      %p86 = scmp.le.s32.totalorder 1, %s10
      %p87 = scmp.lt.s32.totalorder %s10, 3
      %p88 = pnand %p86, %p87
      %p89 = pneg %p88
      // Predicated region
      $region9: #{tpu_custom_call.1} parent=5 // pred_check
        _
      $region10: #{tpu_custom_call.1} parent=5 // pred_check_branch
        %91 = sbr.rel (%p88) target = $region12
      $region11: #{tpu_custom_call.1} parent=5 // pred_region
        %s92 = ssub.s32 %s10, 1
      $region12: #{tpu_custom_call.1} parent=5 // pred_fallthru
        _
      %p93 = scmp.lt.s32.totalorder %s10, 2
      // Predicated region
      $region13: #{tpu_custom_call.1} parent=5 // pred_check
        %p94 = pneg %p93
      $region14: #{tpu_custom_call.1} parent=5 // pred_check_branch
        %96 = sbr.rel (%p94) target = $region16
      $region15: #{tpu_custom_call.1} parent=5 // pred_region
        // Predicated region
        $region17: #{tpu_custom_call.1} parent=15 // pred_check
          %p97 = pneg %p44
        $region18: #{tpu_custom_call.1} parent=15 // pred_check_branch
          %99 = sbr.rel (%p97) target = $region20
        $region19: #{tpu_custom_call.1} parent=15 // pred_region
          %p100 = scmp.lt.s32.totalorder %s17, 1
          %s101 = scalar_select %p100, %s17, 1
          %p102 = scmp.lt.s32.totalorder %s18, 0
          %s103 = scalar_select %p102, %s18, 0
          %s104 = smul.addr %s101, 32
          %s105 = sadd.s32 %s103, %s104
          %s106 = smul.addr %s105, 8
          %s107 = scalar_lea.vmem %s0, %s106
        $region20: #{tpu_custom_call.1} parent=15 // pred_fallthru
          _
      $region16: #{tpu_custom_call.1} parent=5 // pred_fallthru
        _
      %p108 = scmp.le.s32.totalorder 1, %s10
      %p109 = scmp.lt.s32.totalorder %s10, 3
      %p110 = pnand %p108, %p109
      %p111 = pneg %p110
      // Predicated region
      $region21: #{tpu_custom_call.1} parent=5 // pred_check
        _
      $region22: #{tpu_custom_call.1} parent=5 // pred_check_branch
        %113 = sbr.rel (%p110) target = $region24
      $region23: #{tpu_custom_call.1} parent=5 // pred_region
        %s114 = ssub.s32 %s10, 1
        %p115 = scmp.lt.s32.totalorder %s19, 1
        %s116 = scalar_select %p115, %s19, 1
        %p117 = scmp.lt.s32.totalorder %s20, 0
        %s118 = scalar_select %p117, %s20, 0
        %s119 = smul.addr %s116, 32
        %s120 = sadd.s32 %s118, %s119
        %s121 = smul.addr %s120, 8
        %s122 = scalar_lea.vmem %s0, %s121
        %p123 = pneg %p50
        %p124 = pneg %p47
        %p125 = pneg %p78
        %p126 = pneg %p75
        %s127 = sand.u32 %s65, 1
        %s128 = scalar_lea.sflag [#allocation3], %s127
        %s129 = sand.u32 %s65, 1
        %s130 = scalar_lea.vmem [#allocation2], %s129
        %p131 = scmp.lt.s32.totalorder %s19, 1
        %s132 = scalar_select %p131, %s19, 1
        %p133 = scmp.lt.s32.totalorder %s20, 0
        %s134 = scalar_select %p133, %s20, 0
        %s135 = smul.addr %s132, 32
        %s136 = sadd.s32 %s134, %s135
        %s137 = smul.addr %s136, 8
        %s138 = scalar_lea.vmem %s0, %s137
        %v139 = vld [vmem:[%s138] sm:$0xff]
        %v140 = vld [vmem:[%s138 + $0x8] sm:$0xff]
        %v141 = vld [vmem:[%s138 + $0x10] sm:$0xff]
        %v142 = vld [vmem:[%s138 + $0x18] sm:$0xff]
        %v143 = vld [vmem:[%s138 + $0x20] sm:$0xff]
        %v144 = vld [vmem:[%s138 + $0x28] sm:$0xff]
        %v145 = vld [vmem:[%s138 + $0x30] sm:$0xff]
        %v146 = vld [vmem:[%s138 + $0x38] sm:$0xff]
        %v147 = vld [vmem:[%s138 + $0x40] sm:$0xff]
        %v148 = vld [vmem:[%s138 + $0x48] sm:$0xff]
        %v149 = vld [vmem:[%s138 + $0x50] sm:$0xff]
        %v150 = vld [vmem:[%s138 + $0x58] sm:$0xff]
        %v151 = vld [vmem:[%s138 + $0x60] sm:$0xff]
        %v152 = vld [vmem:[%s138 + $0x68] sm:$0xff]
        %v153 = vld [vmem:[%s138 + $0x70] sm:$0xff]
        %v154 = vld [vmem:[%s138 + $0x78] sm:$0xff]
        %v155 = vld [vmem:[%s138 + $0x80] sm:$0xff]
        %v156 = vld [vmem:[%s138 + $0x88] sm:$0xff]
        %v157 = vld [vmem:[%s138 + $0x90] sm:$0xff]
        %v158 = vld [vmem:[%s138 + $0x98] sm:$0xff]
        %v159 = vld [vmem:[%s138 + $0xa0] sm:$0xff]
        %v160 = vld [vmem:[%s138 + $0xa8] sm:$0xff]
        %v161 = vld [vmem:[%s138 + $0xb0] sm:$0xff]
        %v162 = vld [vmem:[%s138 + $0xb8] sm:$0xff]
        %v163 = vld [vmem:[%s138 + $0xc0] sm:$0xff]
        %v164 = vld [vmem:[%s138 + $0xc8] sm:$0xff]
        %v165 = vld [vmem:[%s138 + $0xd0] sm:$0xff]
        %v166 = vld [vmem:[%s138 + $0xd8] sm:$0xff]
        %v167 = vld [vmem:[%s138 + $0xe0] sm:$0xff]
        %v168 = vld [vmem:[%s138 + $0xe8] sm:$0xff]
        %v169 = vld [vmem:[%s138 + $0xf0] sm:$0xff]
        %v170 = vld [vmem:[%s138 + $0xf8] sm:$0xff]
        %v171 = vand.u32 2147483647, %v139
        %v172 = vand.u32 2147483647, %v140
        %v173 = vand.u32 2147483647, %v141
        %v174 = vand.u32 2147483647, %v142
        %v175 = vand.u32 2147483647, %v143
        %v176 = vand.u32 2147483647, %v144
        %v177 = vand.u32 2147483647, %v145
        %v178 = vand.u32 2147483647, %v146
        %v179 = vand.u32 2147483647, %v147
        %v180 = vand.u32 2147483647, %v148
        %v181 = vand.u32 2147483647, %v149
        %v182 = vand.u32 2147483647, %v150
        %v183 = vand.u32 2147483647, %v151
        %v184 = vand.u32 2147483647, %v152
        %v185 = vand.u32 2147483647, %v153
        %v186 = vand.u32 2147483647, %v154
        %v187 = vand.u32 2147483647, %v155
        %v188 = vand.u32 2147483647, %v156
        %v189 = vand.u32 2147483647, %v157
        %v190 = vand.u32 2147483647, %v158
        %v191 = vand.u32 2147483647, %v159
        %v192 = vand.u32 2147483647, %v160
        %v193 = vand.u32 2147483647, %v161
        %v194 = vand.u32 2147483647, %v162
        %v195 = vand.u32 2147483647, %v163
        %v196 = vand.u32 2147483647, %v164
        %v197 = vand.u32 2147483647, %v165
        %v198 = vand.u32 2147483647, %v166
        %v199 = vand.u32 2147483647, %v167
        %v200 = vand.u32 2147483647, %v168
        %v201 = vand.u32 2147483647, %v169
        %v202 = vand.u32 2147483647, %v170
        %vm203 = vcmask 31744
        %v204 = vsel %vm203, %v171, -inf
        %v205 = vsel %vm203, %v173, -inf
        %v206 = vsel %vm203, %v175, -inf
        %v207 = vmax.f32 %v204, %v206
        %v208 = vsel %vm203, %v177, -inf
        %v209 = vmax.f32 %v205, %v208
        %v210 = vsel %vm203, %v179, -inf
        %v211 = vmax.f32 %v207, %v210
        %v212 = vsel %vm203, %v181, -inf
        %v213 = vmax.f32 %v209, %v212
        %v214 = vsel %vm203, %v183, -inf
        %v215 = vmax.f32 %v211, %v214
        %v216 = vsel %vm203, %v185, -inf
        %v217 = vmax.f32 %v213, %v216
        %v218 = vsel %vm203, %v187, -inf
        %v219 = vmax.f32 %v215, %v218
        %v220 = vsel %vm203, %v189, -inf
        %v221 = vmax.f32 %v217, %v220
        %v222 = vsel %vm203, %v191, -inf
        %v223 = vmax.f32 %v219, %v222
        %v224 = vsel %vm203, %v193, -inf
        %v225 = vmax.f32 %v221, %v224
        %v226 = vsel %vm203, %v195, -inf
        %v227 = vmax.f32 %v223, %v226
        %v228 = vsel %vm203, %v197, -inf
        %v229 = vmax.f32 %v225, %v228
        %v230 = vsel %vm203, %v199, -inf
        %v231 = vmax.f32 %v227, %v230
        %v232 = vsel %vm203, %v201, -inf
        %v233 = vmax.f32 %v229, %v232
        %v234 = vmax.f32 %v231, %v233
        %v235 = vsel %vm203, %v172, -inf
        %v236 = vsel %vm203, %v174, -inf
        %v237 = vsel %vm203, %v176, -inf
        %v238 = vmax.f32 %v235, %v237
        %v239 = vsel %vm203, %v178, -inf
        %v240 = vmax.f32 %v236, %v239
        %v241 = vsel %vm203, %v180, -inf
        %v242 = vmax.f32 %v238, %v241
        %v243 = vsel %vm203, %v182, -inf
        %v244 = vmax.f32 %v240, %v243
        %v245 = vsel %vm203, %v184, -inf
        %v246 = vmax.f32 %v242, %v245
        %v247 = vsel %vm203, %v186, -inf
        %v248 = vmax.f32 %v244, %v247
        %v249 = vsel %vm203, %v188, -inf
        %v250 = vmax.f32 %v246, %v249
        %v251 = vsel %vm203, %v190, -inf
        %v252 = vmax.f32 %v248, %v251
        %v253 = vsel %vm203, %v192, -inf
        %v254 = vmax.f32 %v250, %v253
        %v255 = vsel %vm203, %v194, -inf
        %v256 = vmax.f32 %v252, %v255
        %v257 = vsel %vm203, %v196, -inf
        %v258 = vmax.f32 %v254, %v257
        %v259 = vsel %vm203, %v198, -inf
        %v260 = vmax.f32 %v256, %v259
        %v261 = vsel %vm203, %v200, -inf
        %v262 = vmax.f32 %v258, %v261
        %v263 = vsel %vm203, %v202, -inf
        %v264 = vmax.f32 %v260, %v263
        %v265 = vmax.f32 %v262, %v264
        %v266 = vsel %vm203, %v234, -inf
        %v267 = vsel %vm203, %v265, -inf
        %v268 = vmax.f32 %v266, %v267
        %v269 = vrot.slane %v268, 4
        %v270 = vmax.f32 %v268, %v269
        %v271 = vrot.slane %v270, 2
        %v272 = vmax.f32 %v270, %v271
        %v273 = vrot.slane %v272, 1
        %v274 = vmax.f32 %v272, %v273
        %v275 = vmul.f32 %v274, 1.9073486e-06
        %v276 = vlaneseq
        %v277 = vshrl.u32 %v276, 7
        %v278 = vadd.s32 %v277, 8
        loop: start=0, step=1, limit=16
        $region25: #{tpu_custom_call.1} parent=23 // loop_pre_header
          _
        $region26: #{tpu_custom_call.1} parent=23 // loop_header
          %s280 = sphi 0, %s284
          %p281 = scmp.ge.s32.totalorder %s280, 16
          %v285 = vphi %v139, %v1417
          %v286 = vphi %v140, %v1418
          %v287 = vphi %v141, %v1419
          %v288 = vphi %v142, %v1420
          %v289 = vphi %v143, %v1421
          %v290 = vphi %v144, %v1422
          %v291 = vphi %v145, %v1423
          %v292 = vphi %v146, %v1424
          %v293 = vphi %v147, %v1425
          %v294 = vphi %v148, %v1426
          %v295 = vphi %v149, %v1427
          %v296 = vphi %v150, %v1428
          %v297 = vphi %v151, %v1429
          %v298 = vphi %v152, %v1430
          %v299 = vphi %v153, %v1431
          %v300 = vphi %v154, %v1432
          %v301 = vphi %v155, %v1433
          %v302 = vphi %v156, %v1434
          %v303 = vphi %v157, %v1435
          %v304 = vphi %v158, %v1436
          %v305 = vphi %v159, %v1437
          %v306 = vphi %v160, %v1438
          %v307 = vphi %v161, %v1439
          %v308 = vphi %v162, %v1440
          %v309 = vphi %v163, %v1441
          %v310 = vphi %v164, %v1442
          %v311 = vphi %v165, %v1443
          %v312 = vphi %v166, %v1444
          %v313 = vphi %v167, %v1445
          %v314 = vphi %v168, %v1446
          %v315 = vphi %v169, %v1447
          %v316 = vphi %v170, %v1448
          %v317 = vphi 0.0, %v1451
          %v318 = vphi 0.0, %v1452
          %v319 = vphi 0.0, %v1453
        $region27: #{tpu_custom_call.1} parent=23 // loop_header_branch
          %283 = sbr.rel (%p281) target = $region31
        $region28: #{tpu_custom_call.1} parent=23 // loop_body
          %v320 = vsub.f32 1.0, %v317
          %v321 = vsub.f32 1.0, %v318
          %v322 = vand.u32 2147483647, %v285
          %v323 = vand.u32 2147483647, %v286
          %v324 = vand.u32 2147483647, %v287
          %v325 = vand.u32 2147483647, %v288
          %v326 = vand.u32 2147483647, %v289
          %v327 = vand.u32 2147483647, %v290
          %v328 = vand.u32 2147483647, %v291
          %v329 = vand.u32 2147483647, %v292
          %v330 = vand.u32 2147483647, %v293
          %v331 = vand.u32 2147483647, %v294
          %v332 = vand.u32 2147483647, %v295
          %v333 = vand.u32 2147483647, %v296
          %v334 = vand.u32 2147483647, %v297
          %v335 = vand.u32 2147483647, %v298
          %v336 = vand.u32 2147483647, %v299
          %v337 = vand.u32 2147483647, %v300
          %v338 = vand.u32 2147483647, %v301
          %v339 = vand.u32 2147483647, %v302
          %v340 = vand.u32 2147483647, %v303
          %v341 = vand.u32 2147483647, %v304
          %v342 = vand.u32 2147483647, %v305
          %v343 = vand.u32 2147483647, %v306
          %v344 = vand.u32 2147483647, %v307
          %v345 = vand.u32 2147483647, %v308
          %v346 = vand.u32 2147483647, %v309
          %v347 = vand.u32 2147483647, %v310
          %v348 = vand.u32 2147483647, %v311
          %v349 = vand.u32 2147483647, %v312
          %v350 = vand.u32 2147483647, %v313
          %v351 = vand.u32 2147483647, %v314
          %v352 = vand.u32 2147483647, %v315
          %v353 = vand.u32 2147483647, %v316
          %v354 = vsel %vm203, %v322, -inf
          %v355 = vsel %vm203, %v324, -inf
          %v356 = vsel %vm203, %v326, -inf
          %v357 = vmax.f32 %v354, %v356
          %v358 = vsel %vm203, %v328, -inf
          %v359 = vmax.f32 %v355, %v358
          %v360 = vsel %vm203, %v330, -inf
          %v361 = vmax.f32 %v357, %v360
          %v362 = vsel %vm203, %v332, -inf
          %v363 = vmax.f32 %v359, %v362
          %v364 = vsel %vm203, %v334, -inf
          %v365 = vmax.f32 %v361, %v364
          %v366 = vsel %vm203, %v336, -inf
          %v367 = vmax.f32 %v363, %v366
          %v368 = vsel %vm203, %v338, -inf
          %v369 = vmax.f32 %v365, %v368
          %v370 = vsel %vm203, %v340, -inf
          %v371 = vmax.f32 %v367, %v370
          %v372 = vsel %vm203, %v342, -inf
          %v373 = vmax.f32 %v369, %v372
          %v374 = vsel %vm203, %v344, -inf
          %v375 = vmax.f32 %v371, %v374
          %v376 = vsel %vm203, %v346, -inf
          %v377 = vmax.f32 %v373, %v376
          %v378 = vsel %vm203, %v348, -inf
          %v379 = vmax.f32 %v375, %v378
          %v380 = vsel %vm203, %v350, -inf
          %v381 = vmax.f32 %v377, %v380
          %v382 = vsel %vm203, %v352, -inf
          %v383 = vmax.f32 %v379, %v382
          %v384 = vmax.f32 %v381, %v383
          %v385 = vsel %vm203, %v323, -inf
          %v386 = vsel %vm203, %v325, -inf
          %v387 = vsel %vm203, %v327, -inf
          %v388 = vmax.f32 %v385, %v387
          %v389 = vsel %vm203, %v329, -inf
          %v390 = vmax.f32 %v386, %v389
          %v391 = vsel %vm203, %v331, -inf
          %v392 = vmax.f32 %v388, %v391
          %v393 = vsel %vm203, %v333, -inf
          %v394 = vmax.f32 %v390, %v393
          %v395 = vsel %vm203, %v335, -inf
          %v396 = vmax.f32 %v392, %v395
          %v397 = vsel %vm203, %v337, -inf
          %v398 = vmax.f32 %v394, %v397
          %v399 = vsel %vm203, %v339, -inf
          %v400 = vmax.f32 %v396, %v399
          %v401 = vsel %vm203, %v341, -inf
          %v402 = vmax.f32 %v398, %v401
          %v403 = vsel %vm203, %v343, -inf
          %v404 = vmax.f32 %v400, %v403
          %v405 = vsel %vm203, %v345, -inf
          %v406 = vmax.f32 %v402, %v405
          %v407 = vsel %vm203, %v347, -inf
          %v408 = vmax.f32 %v404, %v407
          %v409 = vsel %vm203, %v349, -inf
          %v410 = vmax.f32 %v406, %v409
          %v411 = vsel %vm203, %v351, -inf
          %v412 = vmax.f32 %v408, %v411
          %v413 = vsel %vm203, %v353, -inf
          %v414 = vmax.f32 %v410, %v413
          %v415 = vmax.f32 %v412, %v414
          %v416 = vmul.f32 %v384, %v320
          %v417 = vmul.f32 %v415, %v321
          %v418 = vsel %vm203, %v416, -inf
          %v419 = vsel %vm203, %v417, -inf
          %v420 = vmax.f32 %v418, %v419
          %v421 = vrot.slane %v420, 4
          %v422 = vmax.f32 %v420, %v421
          %v423 = vrot.slane %v422, 2
          %v424 = vmax.f32 %v422, %v423
          %v425 = vrot.slane %v424, 1
          %v426 = vmax.f32 %v424, %v425
          %vm427 = vcmp.gt.f32.partialorder %v426, %v275
          %v428 = vsel %vm427, 1, 0
          %v429 = vcvt.s32.f32 %v428
          %vm430 = vcmp.eq.f32.partialorder %v416, %v426
          %vm431 = vcmp.eq.f32.partialorder %v417, %v426
          %v432 = vsel %vm430, %v277, 16
          %v433 = vsel %vm431, %v278, 16
          %v434 = vsel %vm203, %v432, 2147483647
          %v435 = vsel %vm203, %v433, 2147483647
          %vm436 = vcmp.lt.s32.totalorder %v434, %v435
          %v437 = vsel %vm436, %v434, %v435
          %v438 = vrot.slane %v437, 4
          %vm439 = vcmp.lt.s32.totalorder %v437, %v438
          %v440 = vsel %vm439, %v437, %v438
          %v441 = vrot.slane %v440, 2
          %vm442 = vcmp.lt.s32.totalorder %v440, %v441
          %v443 = vsel %vm442, %v440, %v441
          %v444 = vrot.slane %v443, 1
          %vm445 = vcmp.lt.s32.totalorder %v443, %v444
          %v446 = vsel %vm445, %v443, %v444
          %vm447 = vcmp.eq.s32.totalorder %v277, %v446
          %vm448 = vcmp.eq.s32.totalorder %v278, %v446
          %v449 = vsel %vm447, 1, 0
          %v450 = vsel %vm448, 1, 0
          %v451 = vcvt.s32.f32 %v449
          %v452 = vcvt.s32.f32 %v450
          %v453 = vmul.f32 %v285, %v451
          %v454 = vmul.f32 %v286, %v452
          %v455 = vmul.f32 %v287, %v451
          %v456 = vmul.f32 %v288, %v452
          %v457 = vmul.f32 %v289, %v451
          %v458 = vmul.f32 %v290, %v452
          %v459 = vmul.f32 %v291, %v451
          %v460 = vmul.f32 %v292, %v452
          %v461 = vmul.f32 %v293, %v451
          %v462 = vmul.f32 %v294, %v452
          %v463 = vmul.f32 %v295, %v451
          %v464 = vmul.f32 %v296, %v452
          %v465 = vmul.f32 %v297, %v451
          %v466 = vmul.f32 %v298, %v452
          %v467 = vmul.f32 %v299, %v451
          %v468 = vmul.f32 %v300, %v452
          %v469 = vmul.f32 %v301, %v451
          %v470 = vmul.f32 %v302, %v452
          %v471 = vmul.f32 %v303, %v451
          %v472 = vmul.f32 %v304, %v452
          %v473 = vmul.f32 %v305, %v451
          %v474 = vmul.f32 %v306, %v452
          %v475 = vmul.f32 %v307, %v451
          %v476 = vmul.f32 %v308, %v452
          %v477 = vmul.f32 %v309, %v451
          %v478 = vmul.f32 %v310, %v452
          %v479 = vmul.f32 %v311, %v451
          %v480 = vmul.f32 %v312, %v452
          %v481 = vmul.f32 %v313, %v451
          %v482 = vmul.f32 %v314, %v452
          %v483 = vmul.f32 %v315, %v451
          %v484 = vmul.f32 %v316, %v452
          %v485 = vsel %vm203, %v453, 0.0
          %v486 = vsel %vm203, %v454, 0.0
          %v487 = vadd.f32 %v485, %v486
          %v488 = vrot.slane %v487, 4
          %v489 = vadd.f32 %v487, %v488
          %v490 = vrot.slane %v489, 2
          %v491 = vadd.f32 %v489, %v490
          %v492 = vrot.slane %v491, 1
          %v493 = vadd.f32 %v491, %v492
          %v494 = vsel %vm203, %v455, 0.0
          %v495 = vsel %vm203, %v456, 0.0
          %v496 = vadd.f32 %v494, %v495
          %v497 = vrot.slane %v496, 4
          %v498 = vadd.f32 %v496, %v497
          %v499 = vrot.slane %v498, 2
          %v500 = vadd.f32 %v498, %v499
          %v501 = vrot.slane %v500, 1
          %v502 = vadd.f32 %v500, %v501
          %v503 = vsel %vm203, %v457, 0.0
          %v504 = vsel %vm203, %v458, 0.0
          %v505 = vadd.f32 %v503, %v504
          %v506 = vrot.slane %v505, 4
          %v507 = vadd.f32 %v505, %v506
          %v508 = vrot.slane %v507, 2
          %v509 = vadd.f32 %v507, %v508
          %v510 = vrot.slane %v509, 1
          %v511 = vadd.f32 %v509, %v510
          %v512 = vsel %vm203, %v459, 0.0
          %v513 = vsel %vm203, %v460, 0.0
          %v514 = vadd.f32 %v512, %v513
          %v515 = vrot.slane %v514, 4
          %v516 = vadd.f32 %v514, %v515
          %v517 = vrot.slane %v516, 2
          %v518 = vadd.f32 %v516, %v517
          %v519 = vrot.slane %v518, 1
          %v520 = vadd.f32 %v518, %v519
          %v521 = vsel %vm203, %v461, 0.0
          %v522 = vsel %vm203, %v462, 0.0
          %v523 = vadd.f32 %v521, %v522
          %v524 = vrot.slane %v523, 4
          %v525 = vadd.f32 %v523, %v524
          %v526 = vrot.slane %v525, 2
          %v527 = vadd.f32 %v525, %v526
          %v528 = vrot.slane %v527, 1
          %v529 = vadd.f32 %v527, %v528
          %v530 = vsel %vm203, %v463, 0.0
          %v531 = vsel %vm203, %v464, 0.0
          %v532 = vadd.f32 %v530, %v531
          %v533 = vrot.slane %v532, 4
          %v534 = vadd.f32 %v532, %v533
          %v535 = vrot.slane %v534, 2
          %v536 = vadd.f32 %v534, %v535
          %v537 = vrot.slane %v536, 1
          %v538 = vadd.f32 %v536, %v537
          %v539 = vsel %vm203, %v465, 0.0
          %v540 = vsel %vm203, %v466, 0.0
          %v541 = vadd.f32 %v539, %v540
          %v542 = vrot.slane %v541, 4
          %v543 = vadd.f32 %v541, %v542
          %v544 = vrot.slane %v543, 2
          %v545 = vadd.f32 %v543, %v544
          %v546 = vrot.slane %v545, 1
          %v547 = vadd.f32 %v545, %v546
          %v548 = vsel %vm203, %v467, 0.0
          %v549 = vsel %vm203, %v468, 0.0
          %v550 = vadd.f32 %v548, %v549
          %v551 = vrot.slane %v550, 4
          %v552 = vadd.f32 %v550, %v551
          %v553 = vrot.slane %v552, 2
          %v554 = vadd.f32 %v552, %v553
          %v555 = vrot.slane %v554, 1
          %v556 = vadd.f32 %v554, %v555
          %v557 = vsel %vm203, %v469, 0.0
          %v558 = vsel %vm203, %v470, 0.0
          %v559 = vadd.f32 %v557, %v558
          %v560 = vrot.slane %v559, 4
          %v561 = vadd.f32 %v559, %v560
          %v562 = vrot.slane %v561, 2
          %v563 = vadd.f32 %v561, %v562
          %v564 = vrot.slane %v563, 1
          %v565 = vadd.f32 %v563, %v564
          %v566 = vsel %vm203, %v471, 0.0
          %v567 = vsel %vm203, %v472, 0.0
          %v568 = vadd.f32 %v566, %v567
          %v569 = vrot.slane %v568, 4
          %v570 = vadd.f32 %v568, %v569
          %v571 = vrot.slane %v570, 2
          %v572 = vadd.f32 %v570, %v571
          %v573 = vrot.slane %v572, 1
          %v574 = vadd.f32 %v572, %v573
          %v575 = vsel %vm203, %v473, 0.0
          %v576 = vsel %vm203, %v474, 0.0
          %v577 = vadd.f32 %v575, %v576
          %v578 = vrot.slane %v577, 4
          %v579 = vadd.f32 %v577, %v578
          %v580 = vrot.slane %v579, 2
          %v581 = vadd.f32 %v579, %v580
          %v582 = vrot.slane %v581, 1
          %v583 = vadd.f32 %v581, %v582
          %v584 = vsel %vm203, %v475, 0.0
          %v585 = vsel %vm203, %v476, 0.0
          %v586 = vadd.f32 %v584, %v585
          %v587 = vrot.slane %v586, 4
          %v588 = vadd.f32 %v586, %v587
          %v589 = vrot.slane %v588, 2
          %v590 = vadd.f32 %v588, %v589
          %v591 = vrot.slane %v590, 1
          %v592 = vadd.f32 %v590, %v591
          %v593 = vsel %vm203, %v477, 0.0
          %v594 = vsel %vm203, %v478, 0.0
          %v595 = vadd.f32 %v593, %v594
          %v596 = vrot.slane %v595, 4
          %v597 = vadd.f32 %v595, %v596
          %v598 = vrot.slane %v597, 2
          %v599 = vadd.f32 %v597, %v598
          %v600 = vrot.slane %v599, 1
          %v601 = vadd.f32 %v599, %v600
          %v602 = vsel %vm203, %v479, 0.0
          %v603 = vsel %vm203, %v480, 0.0
          %v604 = vadd.f32 %v602, %v603
          %v605 = vrot.slane %v604, 4
          %v606 = vadd.f32 %v604, %v605
          %v607 = vrot.slane %v606, 2
          %v608 = vadd.f32 %v606, %v607
          %v609 = vrot.slane %v608, 1
          %v610 = vadd.f32 %v608, %v609
          %v611 = vsel %vm203, %v481, 0.0
          %v612 = vsel %vm203, %v482, 0.0
          %v613 = vadd.f32 %v611, %v612
          %v614 = vrot.slane %v613, 4
          %v615 = vadd.f32 %v613, %v614
          %v616 = vrot.slane %v615, 2
          %v617 = vadd.f32 %v615, %v616
          %v618 = vrot.slane %v617, 1
          %v619 = vadd.f32 %v617, %v618
          %v620 = vsel %vm203, %v483, 0.0
          %v621 = vsel %vm203, %v484, 0.0
          %v622 = vadd.f32 %v620, %v621
          %v623 = vrot.slane %v622, 4
          %v624 = vadd.f32 %v622, %v623
          %v625 = vrot.slane %v624, 2
          %v626 = vadd.f32 %v624, %v625
          %v627 = vrot.slane %v626, 1
          %v628 = vadd.f32 %v626, %v627
          %v629 = vand.u32 2147483647, %v493
          %v630 = vand.u32 2147483647, %v502
          %v631 = vand.u32 2147483647, %v511
          %v632 = vand.u32 2147483647, %v520
          %v633 = vand.u32 2147483647, %v529
          %v634 = vand.u32 2147483647, %v538
          %v635 = vand.u32 2147483647, %v547
          %v636 = vand.u32 2147483647, %v556
          %v637 = vand.u32 2147483647, %v565
          %v638 = vand.u32 2147483647, %v574
          %v639 = vand.u32 2147483647, %v583
          %v640 = vand.u32 2147483647, %v592
          %v641 = vand.u32 2147483647, %v601
          %v642 = vand.u32 2147483647, %v610
          %v643 = vand.u32 2147483647, %v619
          %v644 = vand.u32 2147483647, %v628
          %vm645 = vcmp.eq.f32.partialorder %v629, %v426
          %vm646 = vcmp.eq.f32.partialorder %v630, %v426
          %vm647 = vcmp.eq.f32.partialorder %v631, %v426
          %vm648 = vcmp.eq.f32.partialorder %v632, %v426
          %vm649 = vcmp.eq.f32.partialorder %v633, %v426
          %vm650 = vcmp.eq.f32.partialorder %v634, %v426
          %vm651 = vcmp.eq.f32.partialorder %v635, %v426
          %vm652 = vcmp.eq.f32.partialorder %v636, %v426
          %vm653 = vcmp.eq.f32.partialorder %v637, %v426
          %vm654 = vcmp.eq.f32.partialorder %v638, %v426
          %vm655 = vcmp.eq.f32.partialorder %v639, %v426
          %vm656 = vcmp.eq.f32.partialorder %v640, %v426
          %vm657 = vcmp.eq.f32.partialorder %v641, %v426
          %vm658 = vcmp.eq.f32.partialorder %v642, %v426
          %vm659 = vcmp.eq.f32.partialorder %v643, %v426
          %vm660 = vcmp.eq.f32.partialorder %v644, %v426
          %v661 = vrot.slane %v277, 1
          %v662 = vrot.slane %v277, 2
          %v663 = vrot.slane %v277, 3
          %v664 = vrot.slane %v277, 4
          %v665 = vrot.slane %v277, 5
          %v666 = vrot.slane %v277, 6
          %v667 = vrot.slane %v277, 7
          %v668 = vrot.slane %v278, 1
          %v669 = vrot.slane %v278, 2
          %v670 = vrot.slane %v278, 3
          %v671 = vrot.slane %v278, 4
          %v672 = vrot.slane %v278, 5
          %v673 = vrot.slane %v278, 6
          %v674 = vrot.slane %v278, 7
          %v675 = vsel %vm645, %v277, 16
          %v676 = vsel %vm646, %v661, 16
          %v677 = vsel %vm647, %v662, 16
          %v678 = vsel %vm648, %v663, 16
          %v679 = vsel %vm649, %v664, 16
          %v680 = vsel %vm650, %v665, 16
          %v681 = vsel %vm651, %v666, 16
          %v682 = vsel %vm652, %v667, 16
          %v683 = vsel %vm653, %v278, 16
          %v684 = vsel %vm654, %v668, 16
          %v685 = vsel %vm655, %v669, 16
          %v686 = vsel %vm656, %v670, 16
          %v687 = vsel %vm657, %v671, 16
          %v688 = vsel %vm658, %v672, 16
          %v689 = vsel %vm659, %v673, 16
          %v690 = vsel %vm660, %v674, 16
          %vm691 = vcmask 24576
          %v692 = vsel %vm691, %v675, 2147483647
          %v693 = vsel %vm691, %v676, 2147483647
          %v694 = vsel %vm691, %v677, 2147483647
          %v695 = vsel %vm691, %v678, 2147483647
          %v696 = vsel %vm691, %v679, 2147483647
          %vm697 = vcmp.lt.s32.totalorder %v692, %v696
          %v698 = vsel %vm697, %v692, %v696
          %v699 = vsel %vm691, %v680, 2147483647
          %vm700 = vcmp.lt.s32.totalorder %v693, %v699
          %v701 = vsel %vm700, %v693, %v699
          %v702 = vsel %vm691, %v681, 2147483647
          %vm703 = vcmp.lt.s32.totalorder %v694, %v702
          %v704 = vsel %vm703, %v694, %v702
          %v705 = vsel %vm691, %v682, 2147483647
          %vm706 = vcmp.lt.s32.totalorder %v695, %v705
          %v707 = vsel %vm706, %v695, %v705
          %v708 = vsel %vm691, %v683, 2147483647
          %vm709 = vcmp.lt.s32.totalorder %v698, %v708
          %v710 = vsel %vm709, %v698, %v708
          %v711 = vsel %vm691, %v684, 2147483647
          %vm712 = vcmp.lt.s32.totalorder %v701, %v711
          %v713 = vsel %vm712, %v701, %v711
          %v714 = vsel %vm691, %v685, 2147483647
          %vm715 = vcmp.lt.s32.totalorder %v704, %v714
          %v716 = vsel %vm715, %v704, %v714
          %v717 = vsel %vm691, %v686, 2147483647
          %vm718 = vcmp.lt.s32.totalorder %v707, %v717
          %v719 = vsel %vm718, %v707, %v717
          %v720 = vsel %vm691, %v687, 2147483647
          %vm721 = vcmp.lt.s32.totalorder %v710, %v720
          %v722 = vsel %vm721, %v710, %v720
          %v723 = vsel %vm691, %v688, 2147483647
          %vm724 = vcmp.lt.s32.totalorder %v713, %v723
          %v725 = vsel %vm724, %v713, %v723
          %v726 = vsel %vm691, %v689, 2147483647
          %vm727 = vcmp.lt.s32.totalorder %v716, %v726
          %v728 = vsel %vm727, %v716, %v726
          %v729 = vsel %vm691, %v690, 2147483647
          %vm730 = vcmp.lt.s32.totalorder %v719, %v729
          %v731 = vsel %vm730, %v719, %v729
          %vm732 = vcmp.lt.s32.totalorder %v722, %v725
          %v733 = vsel %vm732, %v722, %v725
          %vm734 = vcmp.lt.s32.totalorder %v728, %v731
          %v735 = vsel %vm734, %v728, %v731
          %vm736 = vcmp.lt.s32.totalorder %v733, %v735
          %v737 = vsel %vm736, %v733, %v735
          %v738 = vlaneseq
          %v739 = vshrl.u32 %v738, 7
          %v740 = vsub.s32 0, %v739
          %v741 = vrot.slane %v737, %v740
          %vm742 = vcmp.eq.s32.totalorder %v277, %v741
          %vm743 = vcmp.eq.s32.totalorder %v278, %v741
          %v744 = vsel %vm742, 1, 0
          %v745 = vsel %vm743, 1, 0
          %v746 = vcvt.s32.f32 %v744
          %v747 = vcvt.s32.f32 %v745
          %v750 = vcombine.high %v746, %v746
          %v752 = vunpack.c.l.s4 1966171168
          %v753 = vunpack.c.0.s8 %v752
          %v754 = vlaneseq
          %v755 = vshrl.u32 %v754, 7
          %v756 = vsub.s32 %v753, %v755
          %v757 = vrot.slane %v746, %v756
          %v759 = vunpack.c.l.s4 1966171168
          %v760 = vunpack.c.0.s8 %v759
          %v761 = vlaneseq
          %v762 = vshrl.u32 %v761, 7
          %v763 = vsub.s32 %v760, %v762
          %v764 = vrot.slane %v750, %v763
          %v765 = vcombine.high %v757, %v757
          %v766 = vcombine.high %v764, %v764
          %v768 = vunpack.c.l.s4 1966171168
          %v769 = vunpack.c.0.s8 %v768
          %v770 = vlaneseq
          %v771 = vshrl.u32 %v770, 7
          %v772 = vsub.s32 %v769, %v771
          %v773 = vrot.slane %v757, %v772
          %v775 = vunpack.c.l.s4 1966171168
          %v776 = vunpack.c.0.s8 %v775
          %v777 = vlaneseq
          %v778 = vshrl.u32 %v777, 7
          %v779 = vsub.s32 %v776, %v778
          %v780 = vrot.slane %v764, %v779
          %v782 = vunpack.c.l.s4 1966171168
          %v783 = vunpack.c.0.s8 %v782
          %v784 = vlaneseq
          %v785 = vshrl.u32 %v784, 7
          %v786 = vsub.s32 %v783, %v785
          %v787 = vrot.slane %v765, %v786
          %v789 = vunpack.c.l.s4 1966171168
          %v790 = vunpack.c.0.s8 %v789
          %v791 = vlaneseq
          %v792 = vshrl.u32 %v791, 7
          %v793 = vsub.s32 %v790, %v792
          %v794 = vrot.slane %v766, %v793
          %v795 = vcombine.high %v773, %v773
          %v796 = vcombine.high %v780, %v780
          %v797 = vcombine.high %v787, %v787
          %v798 = vcombine.high %v794, %v794
          %v799 = vcombine.high %v747, %v747
          %v801 = vunpack.c.l.s4 1966171168
          %v802 = vunpack.c.0.s8 %v801
          %v803 = vlaneseq
          %v804 = vshrl.u32 %v803, 7
          %v805 = vsub.s32 %v802, %v804
          %v806 = vrot.slane %v747, %v805
          %v808 = vunpack.c.l.s4 1966171168
          %v809 = vunpack.c.0.s8 %v808
          %v810 = vlaneseq
          %v811 = vshrl.u32 %v810, 7
          %v812 = vsub.s32 %v809, %v811
          %v813 = vrot.slane %v799, %v812
          %v814 = vcombine.high %v806, %v806
          %v815 = vcombine.high %v813, %v813
          %v817 = vunpack.c.l.s4 1966171168
          %v818 = vunpack.c.0.s8 %v817
          %v819 = vlaneseq
          %v820 = vshrl.u32 %v819, 7
          %v821 = vsub.s32 %v818, %v820
          %v822 = vrot.slane %v806, %v821
          %v824 = vunpack.c.l.s4 1966171168
          %v825 = vunpack.c.0.s8 %v824
          %v826 = vlaneseq
          %v827 = vshrl.u32 %v826, 7
          %v828 = vsub.s32 %v825, %v827
          %v829 = vrot.slane %v813, %v828
          %v831 = vunpack.c.l.s4 1966171168
          %v832 = vunpack.c.0.s8 %v831
          %v833 = vlaneseq
          %v834 = vshrl.u32 %v833, 7
          %v835 = vsub.s32 %v832, %v834
          %v836 = vrot.slane %v814, %v835
          %v838 = vunpack.c.l.s4 1966171168
          %v839 = vunpack.c.0.s8 %v838
          %v840 = vlaneseq
          %v841 = vshrl.u32 %v840, 7
          %v842 = vsub.s32 %v839, %v841
          %v843 = vrot.slane %v815, %v842
          %v844 = vcombine.high %v822, %v822
          %v845 = vcombine.high %v829, %v829
          %v846 = vcombine.high %v836, %v836
          %v847 = vcombine.high %v843, %v843
          %v848 = vlaneseq
          %v849 = vshrl.u32 %v848, 7
          %v850 = vsub.s32 0, %v849
          %v851 = vrot.slane %v773, %v850
          %v852 = vlaneseq
          %v853 = vshrl.u32 %v852, 7
          %v854 = vsub.s32 0, %v853
          %v855 = vrot.slane %v787, %v854
          %v856 = vlaneseq
          %v857 = vshrl.u32 %v856, 7
          %v858 = vsub.s32 0, %v857
          %v859 = vrot.slane %v795, %v858
          %v860 = vlaneseq
          %v861 = vshrl.u32 %v860, 7
          %v862 = vsub.s32 0, %v861
          %v863 = vrot.slane %v797, %v862
          %v864 = vlaneseq
          %v865 = vshrl.u32 %v864, 7
          %v866 = vsub.s32 0, %v865
          %v867 = vrot.slane %v780, %v866
          %v868 = vlaneseq
          %v869 = vshrl.u32 %v868, 7
          %v870 = vsub.s32 0, %v869
          %v871 = vrot.slane %v794, %v870
          %v872 = vlaneseq
          %v873 = vshrl.u32 %v872, 7
          %v874 = vsub.s32 0, %v873
          %v875 = vrot.slane %v796, %v874
          %v876 = vlaneseq
          %v877 = vshrl.u32 %v876, 7
          %v878 = vsub.s32 0, %v877
          %v879 = vrot.slane %v798, %v878
          %v880 = vlaneseq
          %v881 = vshrl.u32 %v880, 7
          %v882 = vsub.s32 0, %v881
          %v883 = vrot.slane %v822, %v882
          %v884 = vlaneseq
          %v885 = vshrl.u32 %v884, 7
          %v886 = vsub.s32 0, %v885
          %v887 = vrot.slane %v836, %v886
          %v888 = vlaneseq
          %v889 = vshrl.u32 %v888, 7
          %v890 = vsub.s32 0, %v889
          %v891 = vrot.slane %v844, %v890
          %v892 = vlaneseq
          %v893 = vshrl.u32 %v892, 7
          %v894 = vsub.s32 0, %v893
          %v895 = vrot.slane %v846, %v894
          %v896 = vlaneseq
          %v897 = vshrl.u32 %v896, 7
          %v898 = vsub.s32 0, %v897
          %v899 = vrot.slane %v829, %v898
          %v900 = vlaneseq
          %v901 = vshrl.u32 %v900, 7
          %v902 = vsub.s32 0, %v901
          %v903 = vrot.slane %v843, %v902
          %v904 = vlaneseq
          %v905 = vshrl.u32 %v904, 7
          %v906 = vsub.s32 0, %v905
          %v907 = vrot.slane %v845, %v906
          %v908 = vlaneseq
          %v909 = vshrl.u32 %v908, 7
          %v910 = vsub.s32 0, %v909
          %v911 = vrot.slane %v847, %v910
          %v928 = vmul.f32 %v285, %v851
          %v929 = vmul.f32 %v286, %v851
          %v930 = vmul.f32 %v287, %v855
          %v931 = vmul.f32 %v288, %v855
          %v932 = vmul.f32 %v289, %v859
          %v933 = vmul.f32 %v290, %v859
          %v934 = vmul.f32 %v291, %v863
          %v935 = vmul.f32 %v292, %v863
          %v936 = vmul.f32 %v293, %v867
          %v937 = vmul.f32 %v294, %v867
          %v938 = vmul.f32 %v295, %v871
          %v939 = vmul.f32 %v296, %v871
          %v940 = vmul.f32 %v297, %v875
          %v941 = vmul.f32 %v298, %v875
          %v942 = vmul.f32 %v299, %v879
          %v943 = vmul.f32 %v300, %v879
          %v944 = vmul.f32 %v301, %v883
          %v945 = vmul.f32 %v302, %v883
          %v946 = vmul.f32 %v303, %v887
          %v947 = vmul.f32 %v304, %v887
          %v948 = vmul.f32 %v305, %v891
          %v949 = vmul.f32 %v306, %v891
          %v950 = vmul.f32 %v307, %v895
          %v951 = vmul.f32 %v308, %v895
          %v952 = vmul.f32 %v309, %v899
          %v953 = vmul.f32 %v310, %v899
          %v954 = vmul.f32 %v311, %v903
          %v955 = vmul.f32 %v312, %v903
          %v956 = vmul.f32 %v313, %v907
          %v957 = vmul.f32 %v314, %v907
          %v958 = vmul.f32 %v315, %v911
          %v959 = vmul.f32 %v316, %v911
          %v960 = vsel %vm203, %v928, 0.0
          %v961 = vsel %vm203, %v930, 0.0
          %v962 = vadd.f32 %v960, %v961
          %v963 = vsel %vm203, %v932, 0.0
          %v964 = vadd.f32 %v962, %v963
          %v965 = vsel %vm203, %v934, 0.0
          %v966 = vadd.f32 %v964, %v965
          %v967 = vsel %vm203, %v936, 0.0
          %v968 = vadd.f32 %v966, %v967
          %v969 = vsel %vm203, %v938, 0.0
          %v970 = vadd.f32 %v968, %v969
          %v971 = vsel %vm203, %v940, 0.0
          %v972 = vadd.f32 %v970, %v971
          %v973 = vsel %vm203, %v942, 0.0
          %v974 = vadd.f32 %v972, %v973
          %v975 = vsel %vm203, %v944, 0.0
          %v976 = vadd.f32 %v974, %v975
          %v977 = vsel %vm203, %v946, 0.0
          %v978 = vadd.f32 %v976, %v977
          %v979 = vsel %vm203, %v948, 0.0
          %v980 = vadd.f32 %v978, %v979
          %v981 = vsel %vm203, %v950, 0.0
          %v982 = vadd.f32 %v980, %v981
          %v983 = vsel %vm203, %v952, 0.0
          %v984 = vadd.f32 %v982, %v983
          %v985 = vsel %vm203, %v954, 0.0
          %v986 = vadd.f32 %v984, %v985
          %v987 = vsel %vm203, %v956, 0.0
          %v988 = vadd.f32 %v986, %v987
          %v989 = vsel %vm203, %v958, 0.0
          %v990 = vadd.f32 %v988, %v989
          %v991 = vsel %vm203, %v929, 0.0
          %v992 = vsel %vm203, %v931, 0.0
          %v993 = vadd.f32 %v991, %v992
          %v994 = vsel %vm203, %v933, 0.0
          %v995 = vadd.f32 %v993, %v994
          %v996 = vsel %vm203, %v935, 0.0
          %v997 = vadd.f32 %v995, %v996
          %v998 = vsel %vm203, %v937, 0.0
          %v999 = vadd.f32 %v997, %v998
          %v1000 = vsel %vm203, %v939, 0.0
          %v1001 = vadd.f32 %v999, %v1000
          %v1002 = vsel %vm203, %v941, 0.0
          %v1003 = vadd.f32 %v1001, %v1002
          %v1004 = vsel %vm203, %v943, 0.0
          %v1005 = vadd.f32 %v1003, %v1004
          %v1006 = vsel %vm203, %v945, 0.0
          %v1007 = vadd.f32 %v1005, %v1006
          %v1008 = vsel %vm203, %v947, 0.0
          %v1009 = vadd.f32 %v1007, %v1008
          %v1010 = vsel %vm203, %v949, 0.0
          %v1011 = vadd.f32 %v1009, %v1010
          %v1012 = vsel %vm203, %v951, 0.0
          %v1013 = vadd.f32 %v1011, %v1012
          %v1014 = vsel %vm203, %v953, 0.0
          %v1015 = vadd.f32 %v1013, %v1014
          %v1016 = vsel %vm203, %v955, 0.0
          %v1017 = vadd.f32 %v1015, %v1016
          %v1018 = vsel %vm203, %v957, 0.0
          %v1019 = vadd.f32 %v1017, %v1018
          %v1020 = vsel %vm203, %v959, 0.0
          %v1021 = vadd.f32 %v1019, %v1020
          %v1022 = vrot.slane %v746, 1
          %v1023 = vrot.slane %v746, 2
          %v1024 = vrot.slane %v746, 3
          %v1025 = vrot.slane %v746, 4
          %v1026 = vrot.slane %v746, 5
          %v1027 = vrot.slane %v746, 6
          %v1028 = vrot.slane %v746, 7
          %v1029 = vrot.slane %v747, 1
          %v1030 = vrot.slane %v747, 2
          %v1031 = vrot.slane %v747, 3
          %v1032 = vrot.slane %v747, 4
          %v1033 = vrot.slane %v747, 5
          %v1034 = vrot.slane %v747, 6
          %v1035 = vrot.slane %v747, 7
          %v1052 = vmul.f32 %v493, %v746
          %v1053 = vmul.f32 %v502, %v1022
          %v1054 = vmul.f32 %v511, %v1023
          %v1055 = vmul.f32 %v520, %v1024
          %v1056 = vmul.f32 %v529, %v1025
          %v1057 = vmul.f32 %v538, %v1026
          %v1058 = vmul.f32 %v547, %v1027
          %v1059 = vmul.f32 %v556, %v1028
          %v1060 = vmul.f32 %v565, %v747
          %v1061 = vmul.f32 %v574, %v1029
          %v1062 = vmul.f32 %v583, %v1030
          %v1063 = vmul.f32 %v592, %v1031
          %v1064 = vmul.f32 %v601, %v1032
          %v1065 = vmul.f32 %v610, %v1033
          %v1066 = vmul.f32 %v619, %v1034
          %v1067 = vmul.f32 %v628, %v1035
          %v1084 = vrot.slane %v1053, 7
          %vm1085 = vcmask 1041409
          %v1086 = vsel %vm1085, %v1084, %v1052
          %v1087 = vrot.slane %v1054, 6
          %vm1088 = vcmask 1042434
          %v1089 = vsel %vm1088, %v1087, %v1086
          %v1090 = vrot.slane %v1055, 5
          %vm1091 = vcmask 1043459
          %v1092 = vsel %vm1091, %v1090, %v1089
          %v1093 = vrot.slane %v1056, 4
          %vm1094 = vcmask 1044484
          %v1095 = vsel %vm1094, %v1093, %v1092
          %v1096 = vrot.slane %v1057, 3
          %vm1097 = vcmask 1045509
          %v1098 = vsel %vm1097, %v1096, %v1095
          %v1099 = vrot.slane %v1058, 2
          %vm1100 = vcmask 1046534
          %v1101 = vsel %vm1100, %v1099, %v1098
          %v1102 = vrot.slane %v1059, 1
          %vm1103 = vcmask 1047559
          %v1104 = vsel %vm1103, %v1102, %v1101
          %v1105 = vrot.slane %v1061, 7
          %v1106 = vsel %vm1085, %v1105, %v1060
          %v1107 = vrot.slane %v1062, 6
          %v1108 = vsel %vm1088, %v1107, %v1106
          %v1109 = vrot.slane %v1063, 5
          %v1110 = vsel %vm1091, %v1109, %v1108
          %v1111 = vrot.slane %v1064, 4
          %v1112 = vsel %vm1094, %v1111, %v1110
          %v1113 = vrot.slane %v1065, 3
          %v1114 = vsel %vm1097, %v1113, %v1112
          %v1115 = vrot.slane %v1066, 2
          %v1116 = vsel %vm1100, %v1115, %v1114
          %v1117 = vrot.slane %v1067, 1
          %v1118 = vsel %vm1103, %v1117, %v1116
          %v1121 = vsel %vm203, %v1104, 0.0
          %v1122 = vsel %vm203, %v1118, 0.0
          %v1123 = vadd.f32 %v1121, %v1122
          %v1124 = vrot.slane %v1123, 4
          %v1125 = vadd.f32 %v1123, %v1124
          %v1126 = vrot.slane %v1125, 2
          %v1127 = vadd.f32 %v1125, %v1126
          %v1128 = vrot.slane %v1127, 1
          %v1129 = vadd.f32 %v1127, %v1128
          %v1130 = vand.u32 2147483647, %v1129
          %vm1131 = vcmp.gt.f32.partialorder %v1130, 0.0
          %v1132 = vsel %vm1131, %v1129, 1.0
          %v1133 = vrcp.pop %v1132
          %v1134 = vmul.f32 1.0, %v1133
          %v1135 = vlaneseq
          %v1136 = vshrl.u32 %v1135, 7
          %v1137 = vsub.s32 0, %v1136
          %v1138 = vrot.slane %v1134, %v1137
          %v1139 = vmul.f32 %v493, %v1138
          %v1140 = vmul.f32 %v502, %v1138
          %v1141 = vmul.f32 %v511, %v1138
          %v1142 = vmul.f32 %v520, %v1138
          %v1143 = vmul.f32 %v529, %v1138
          %v1144 = vmul.f32 %v538, %v1138
          %v1145 = vmul.f32 %v547, %v1138
          %v1146 = vmul.f32 %v556, %v1138
          %v1147 = vmul.f32 %v565, %v1138
          %v1148 = vmul.f32 %v574, %v1138
          %v1149 = vmul.f32 %v583, %v1138
          %v1150 = vmul.f32 %v592, %v1138
          %v1151 = vmul.f32 %v601, %v1138
          %v1152 = vmul.f32 %v610, %v1138
          %v1153 = vmul.f32 %v619, %v1138
          %v1154 = vmul.f32 %v628, %v1138
          %v1171 = vrot.slane %v1140, 7
          %v1172 = vsel %vm1085, %v1171, %v1139
          %v1173 = vrot.slane %v1141, 6
          %v1174 = vsel %vm1088, %v1173, %v1172
          %v1175 = vrot.slane %v1142, 5
          %v1176 = vsel %vm1091, %v1175, %v1174
          %v1177 = vrot.slane %v1143, 4
          %v1178 = vsel %vm1094, %v1177, %v1176
          %v1179 = vrot.slane %v1144, 3
          %v1180 = vsel %vm1097, %v1179, %v1178
          %v1181 = vrot.slane %v1145, 2
          %v1182 = vsel %vm1100, %v1181, %v1180
          %v1183 = vrot.slane %v1146, 1
          %v1184 = vsel %vm1103, %v1183, %v1182
          %v1185 = vrot.slane %v1148, 7
          %v1186 = vsel %vm1085, %v1185, %v1147
          %v1187 = vrot.slane %v1149, 6
          %v1188 = vsel %vm1088, %v1187, %v1186
          %v1189 = vrot.slane %v1150, 5
          %v1190 = vsel %vm1091, %v1189, %v1188
          %v1191 = vrot.slane %v1151, 4
          %v1192 = vsel %vm1094, %v1191, %v1190
          %v1193 = vrot.slane %v1152, 3
          %v1194 = vsel %vm1097, %v1193, %v1192
          %v1195 = vrot.slane %v1153, 2
          %v1196 = vsel %vm1100, %v1195, %v1194
          %v1197 = vrot.slane %v1154, 1
          %v1198 = vsel %vm1103, %v1197, %v1196
          %v1201 = vsel %vm742, 1.0, %v1184
          %v1202 = vsel %vm743, 1.0, %v1198
          %v1203 = vmul.f32 %v1201, %v429
          %v1204 = vmul.f32 %v1202, %v429
          %v1207 = vcombine.high %v1203, %v1203
          %v1209 = vunpack.c.l.s4 1966171168
          %v1210 = vunpack.c.0.s8 %v1209
          %v1211 = vlaneseq
          %v1212 = vshrl.u32 %v1211, 7
          %v1213 = vsub.s32 %v1210, %v1212
          %v1214 = vrot.slane %v1203, %v1213
          %v1216 = vunpack.c.l.s4 1966171168
          %v1217 = vunpack.c.0.s8 %v1216
          %v1218 = vlaneseq
          %v1219 = vshrl.u32 %v1218, 7
          %v1220 = vsub.s32 %v1217, %v1219
          %v1221 = vrot.slane %v1207, %v1220
          %v1222 = vcombine.high %v1214, %v1214
          %v1223 = vcombine.high %v1221, %v1221
          %v1225 = vunpack.c.l.s4 1966171168
          %v1226 = vunpack.c.0.s8 %v1225
          %v1227 = vlaneseq
          %v1228 = vshrl.u32 %v1227, 7
          %v1229 = vsub.s32 %v1226, %v1228
          %v1230 = vrot.slane %v1214, %v1229
          %v1232 = vunpack.c.l.s4 1966171168
          %v1233 = vunpack.c.0.s8 %v1232
          %v1234 = vlaneseq
          %v1235 = vshrl.u32 %v1234, 7
          %v1236 = vsub.s32 %v1233, %v1235
          %v1237 = vrot.slane %v1221, %v1236
          %v1239 = vunpack.c.l.s4 1966171168
          %v1240 = vunpack.c.0.s8 %v1239
          %v1241 = vlaneseq
          %v1242 = vshrl.u32 %v1241, 7
          %v1243 = vsub.s32 %v1240, %v1242
          %v1244 = vrot.slane %v1222, %v1243
          %v1246 = vunpack.c.l.s4 1966171168
          %v1247 = vunpack.c.0.s8 %v1246
          %v1248 = vlaneseq
          %v1249 = vshrl.u32 %v1248, 7
          %v1250 = vsub.s32 %v1247, %v1249
          %v1251 = vrot.slane %v1223, %v1250
          %v1252 = vcombine.high %v1230, %v1230
          %v1253 = vcombine.high %v1237, %v1237
          %v1254 = vcombine.high %v1244, %v1244
          %v1255 = vcombine.high %v1251, %v1251
          %v1256 = vcombine.high %v1204, %v1204
          %v1258 = vunpack.c.l.s4 1966171168
          %v1259 = vunpack.c.0.s8 %v1258
          %v1260 = vlaneseq
          %v1261 = vshrl.u32 %v1260, 7
          %v1262 = vsub.s32 %v1259, %v1261
          %v1263 = vrot.slane %v1204, %v1262
          %v1265 = vunpack.c.l.s4 1966171168
          %v1266 = vunpack.c.0.s8 %v1265
          %v1267 = vlaneseq
          %v1268 = vshrl.u32 %v1267, 7
          %v1269 = vsub.s32 %v1266, %v1268
          %v1270 = vrot.slane %v1256, %v1269
          %v1271 = vcombine.high %v1263, %v1263
          %v1272 = vcombine.high %v1270, %v1270
          %v1274 = vunpack.c.l.s4 1966171168
          %v1275 = vunpack.c.0.s8 %v1274
          %v1276 = vlaneseq
          %v1277 = vshrl.u32 %v1276, 7
          %v1278 = vsub.s32 %v1275, %v1277
          %v1279 = vrot.slane %v1263, %v1278
          %v1281 = vunpack.c.l.s4 1966171168
          %v1282 = vunpack.c.0.s8 %v1281
          %v1283 = vlaneseq
          %v1284 = vshrl.u32 %v1283, 7
          %v1285 = vsub.s32 %v1282, %v1284
          %v1286 = vrot.slane %v1270, %v1285
          %v1288 = vunpack.c.l.s4 1966171168
          %v1289 = vunpack.c.0.s8 %v1288
          %v1290 = vlaneseq
          %v1291 = vshrl.u32 %v1290, 7
          %v1292 = vsub.s32 %v1289, %v1291
          %v1293 = vrot.slane %v1271, %v1292
          %v1295 = vunpack.c.l.s4 1966171168
          %v1296 = vunpack.c.0.s8 %v1295
          %v1297 = vlaneseq
          %v1298 = vshrl.u32 %v1297, 7
          %v1299 = vsub.s32 %v1296, %v1298
          %v1300 = vrot.slane %v1272, %v1299
          %v1301 = vcombine.high %v1279, %v1279
          %v1302 = vcombine.high %v1286, %v1286
          %v1303 = vcombine.high %v1293, %v1293
          %v1304 = vcombine.high %v1300, %v1300
          %v1305 = vlaneseq
          %v1306 = vshrl.u32 %v1305, 7
          %v1307 = vsub.s32 0, %v1306
          %v1308 = vrot.slane %v1230, %v1307
          %v1309 = vlaneseq
          %v1310 = vshrl.u32 %v1309, 7
          %v1311 = vsub.s32 0, %v1310
          %v1312 = vrot.slane %v1244, %v1311
          %v1313 = vlaneseq
          %v1314 = vshrl.u32 %v1313, 7
          %v1315 = vsub.s32 0, %v1314
          %v1316 = vrot.slane %v1252, %v1315
          %v1317 = vlaneseq
          %v1318 = vshrl.u32 %v1317, 7
          %v1319 = vsub.s32 0, %v1318
          %v1320 = vrot.slane %v1254, %v1319
          %v1321 = vlaneseq
          %v1322 = vshrl.u32 %v1321, 7
          %v1323 = vsub.s32 0, %v1322
          %v1324 = vrot.slane %v1237, %v1323
          %v1325 = vlaneseq
          %v1326 = vshrl.u32 %v1325, 7
          %v1327 = vsub.s32 0, %v1326
          %v1328 = vrot.slane %v1251, %v1327
          %v1329 = vlaneseq
          %v1330 = vshrl.u32 %v1329, 7
          %v1331 = vsub.s32 0, %v1330
          %v1332 = vrot.slane %v1253, %v1331
          %v1333 = vlaneseq
          %v1334 = vshrl.u32 %v1333, 7
          %v1335 = vsub.s32 0, %v1334
          %v1336 = vrot.slane %v1255, %v1335
          %v1337 = vlaneseq
          %v1338 = vshrl.u32 %v1337, 7
          %v1339 = vsub.s32 0, %v1338
          %v1340 = vrot.slane %v1279, %v1339
          %v1341 = vlaneseq
          %v1342 = vshrl.u32 %v1341, 7
          %v1343 = vsub.s32 0, %v1342
          %v1344 = vrot.slane %v1293, %v1343
          %v1345 = vlaneseq
          %v1346 = vshrl.u32 %v1345, 7
          %v1347 = vsub.s32 0, %v1346
          %v1348 = vrot.slane %v1301, %v1347
          %v1349 = vlaneseq
          %v1350 = vshrl.u32 %v1349, 7
          %v1351 = vsub.s32 0, %v1350
          %v1352 = vrot.slane %v1303, %v1351
          %v1353 = vlaneseq
          %v1354 = vshrl.u32 %v1353, 7
          %v1355 = vsub.s32 0, %v1354
          %v1356 = vrot.slane %v1286, %v1355
          %v1357 = vlaneseq
          %v1358 = vshrl.u32 %v1357, 7
          %v1359 = vsub.s32 0, %v1358
          %v1360 = vrot.slane %v1300, %v1359
          %v1361 = vlaneseq
          %v1362 = vshrl.u32 %v1361, 7
          %v1363 = vsub.s32 0, %v1362
          %v1364 = vrot.slane %v1302, %v1363
          %v1365 = vlaneseq
          %v1366 = vshrl.u32 %v1365, 7
          %v1367 = vsub.s32 0, %v1366
          %v1368 = vrot.slane %v1304, %v1367
          %v1385 = vmul.f32 %v1308, %v990
          %v1386 = vmul.f32 %v1308, %v1021
          %v1387 = vmul.f32 %v1312, %v990
          %v1388 = vmul.f32 %v1312, %v1021
          %v1389 = vmul.f32 %v1316, %v990
          %v1390 = vmul.f32 %v1316, %v1021
          %v1391 = vmul.f32 %v1320, %v990
          %v1392 = vmul.f32 %v1320, %v1021
          %v1393 = vmul.f32 %v1324, %v990
          %v1394 = vmul.f32 %v1324, %v1021
          %v1395 = vmul.f32 %v1328, %v990
          %v1396 = vmul.f32 %v1328, %v1021
          %v1397 = vmul.f32 %v1332, %v990
          %v1398 = vmul.f32 %v1332, %v1021
          %v1399 = vmul.f32 %v1336, %v990
          %v1400 = vmul.f32 %v1336, %v1021
          %v1401 = vmul.f32 %v1340, %v990
          %v1402 = vmul.f32 %v1340, %v1021
          %v1403 = vmul.f32 %v1344, %v990
          %v1404 = vmul.f32 %v1344, %v1021
          %v1405 = vmul.f32 %v1348, %v990
          %v1406 = vmul.f32 %v1348, %v1021
          %v1407 = vmul.f32 %v1352, %v990
          %v1408 = vmul.f32 %v1352, %v1021
          %v1409 = vmul.f32 %v1356, %v990
          %v1410 = vmul.f32 %v1356, %v1021
          %v1411 = vmul.f32 %v1360, %v990
          %v1412 = vmul.f32 %v1360, %v1021
          %v1413 = vmul.f32 %v1364, %v990
          %v1414 = vmul.f32 %v1364, %v1021
          %v1415 = vmul.f32 %v1368, %v990
          %v1416 = vmul.f32 %v1368, %v1021
          %v1417 = vsub.f32 %v285, %v1385
          %v1418 = vsub.f32 %v286, %v1386
          %v1419 = vsub.f32 %v287, %v1387
          %v1420 = vsub.f32 %v288, %v1388
          %v1421 = vsub.f32 %v289, %v1389
          %v1422 = vsub.f32 %v290, %v1390
          %v1423 = vsub.f32 %v291, %v1391
          %v1424 = vsub.f32 %v292, %v1392
          %v1425 = vsub.f32 %v293, %v1393
          %v1426 = vsub.f32 %v294, %v1394
          %v1427 = vsub.f32 %v295, %v1395
          %v1428 = vsub.f32 %v296, %v1396
          %v1429 = vsub.f32 %v297, %v1397
          %v1430 = vsub.f32 %v298, %v1398
          %v1431 = vsub.f32 %v299, %v1399
          %v1432 = vsub.f32 %v300, %v1400
          %v1433 = vsub.f32 %v301, %v1401
          %v1434 = vsub.f32 %v302, %v1402
          %v1435 = vsub.f32 %v303, %v1403
          %v1436 = vsub.f32 %v304, %v1404
          %v1437 = vsub.f32 %v305, %v1405
          %v1438 = vsub.f32 %v306, %v1406
          %v1439 = vsub.f32 %v307, %v1407
          %v1440 = vsub.f32 %v308, %v1408
          %v1441 = vsub.f32 %v309, %v1409
          %v1442 = vsub.f32 %v310, %v1410
          %v1443 = vsub.f32 %v311, %v1411
          %v1444 = vsub.f32 %v312, %v1412
          %v1445 = vsub.f32 %v313, %v1413
          %v1446 = vsub.f32 %v314, %v1414
          %v1447 = vsub.f32 %v315, %v1415
          %v1448 = vsub.f32 %v316, %v1416
          %v1449 = vmul.f32 %v451, %v429
          %v1450 = vmul.f32 %v452, %v429
          %v1451 = vmax.f32 %v317, %v1449
          %v1452 = vmax.f32 %v318, %v1450
          %v1453 = vadd.f32 %v319, %v429
        $region29: #{tpu_custom_call.1} parent=23 // loop_footer
          %s284 = sadd.s32 1, %s280
        $region30: #{tpu_custom_call.1} parent=23 // loop_footer_branch
          %279 = sbr.rel target = $region26
        $region31: #{tpu_custom_call.1} parent=23 // loop_exit
          _
        %vm1454 = vcmask 24576
        %1455 = vst.msk [vmem:[%s130] sm:$0x1] %vm1454, %v319
        %s1456 = sand.u32 %s65, 1
        %s1457 = scalar_lea.sflag [#allocation3], %s1456
        %s1458 = sand.u32 %s65, 1
        %s1459 = scalar_lea.vmem [#allocation2], %s1458
        // Predicated region
        $region32: #{tpu_custom_call.1} parent=23 // pred_check
          %p1460 = pneg %p75
        $region33: #{tpu_custom_call.1} parent=23 // pred_check_branch
          %1462 = sbr.rel (%p1460) target = $region35
        $region34: #{tpu_custom_call.1} parent=23 // pred_region
          %s1464 = ssub.s32 16, 16
          %1465 = vsyncadd %s1457, %s1464
          %s1466 = sadd.s32 %s20, %s19
          %s1467 = smul.addr %s1466, 16
          %s1468 = scalar_lea.hbm %s1, %s1467
          %s1470 = sshll.u32 %s1459, 4
          %s1471 = int_to_ptr.vmem [resolvable:$true] %s1470
          %1473 = dma.vmem_to_hbm [thread:$0]  %s1471, 16, %s1468, %s1457
        $region35: #{tpu_custom_call.1} parent=23 // pred_fallthru
          _
      $region24: #{tpu_custom_call.1} parent=5 // pred_fallthru
        _
      %p1474 = scmp.le.s32.totalorder 2, %s10
      // Predicated region
      $region36: #{tpu_custom_call.1} parent=5 // pred_check
        %p1475 = pneg %p1474
      $region37: #{tpu_custom_call.1} parent=5 // pred_check_branch
        %1477 = sbr.rel (%p1475) target = $region39
      $region38: #{tpu_custom_call.1} parent=5 // pred_region
        %s1478 = ssub.s32 %s10, 2
        // Predicated region
        $region40: #{tpu_custom_call.1} parent=38 // pred_check
          %p1479 = pneg %p81
        $region41: #{tpu_custom_call.1} parent=38 // pred_check_branch
          %1481 = sbr.rel (%p1479) target = $region43
        $region42: #{tpu_custom_call.1} parent=38 // pred_region
          %s1482 = sand.u32 %s66, 1
          %s1483 = scalar_lea.sflag [#allocation3], %s1482
          %s1484 = sand.u32 %s66, 1
          %s1485 = scalar_lea.vmem [#allocation2], %s1484
          %1486 = dma.done %s1483, 16
        $region43: #{tpu_custom_call.1} parent=38 // pred_fallthru
          _
      $region39: #{tpu_custom_call.1} parent=5 // pred_fallthru
        _
    $region6: #{tpu_custom_call.1} parent=1 // loop_footer
      %s14 = sadd.s32 1, %s10
    $region7: #{tpu_custom_call.1} parent=1 // loop_footer_branch
      %9 = sbr.rel target = $region3
    $region8: #{tpu_custom_call.1} parent=1 // loop_exit
      _
    %1487 = vsyncpa [#allocation3], 1
    %s1488 = scalar_lea.sflag [#allocation3], 1
    %1489 = vsyncpa %s1488, 1

</llo_original>
